<compile_context>
chip_gen: v7x
topology: tpu7x:2x2x1
jax: 0.10.0
libtpu: 0.0.40
codegen_flags: <defaults>
</compile_context>

<pallas_src>
import functools
import math

import numpy as np
import jax
import jax.numpy as jnp
from jax.experimental import pallas as pl
from jax.experimental.pallas import tpu as pltpu

NEG_INF = float("-inf")


# --------------------------------------------------------------------------
# Pallas kernel: attention over history + score_net Linear + one GRU step.
# --------------------------------------------------------------------------
def _eernn_kernel(attn_k, use_attn, use_pred,
                  # SMEM scalar inputs
                  score_ref, b_sc_ref,
                  # VMEM tensor inputs
                  q_ref, qs_t_ref, hs_ref, h_ref,
                  w_sc_ref, w_gru_ref, b_gru_ref,
                  # outputs
                  pred_ref, h_out_ref):
    f32 = jnp.float32
    bf16 = jnp.bfloat16
    Q = q_ref.shape[1]
    H = h_ref.shape[1]
    T = qs_t_ref.shape[1]

    q = q_ref[...]                     # (1, Q) f32
    h_prev = h_ref[...]                # (1, H) f32

    if use_attn:
        # ---- attention over history (alpha = question @ questions^T) ------
        # questions were pre-transposed in the wrapper -> standard (1,Q)x(Q,T)
        alpha = jnp.dot(q, qs_t_ref[...], preferred_element_type=f32)  # (1,T)

        # ---- top-k threshold, fully unrolled (k is a static Python int) ----
        # TODO(synk): torch.topk's exact tie-breaking is not reproduced; ties
        # at the threshold are all kept (measure zero for continuous inputs).
        k = min(T, attn_k)
        work = alpha
        kth = None
        mmax = None
        for i in range(k):
            m = jnp.max(work)
            if i == 0:
                mmax = m               # global max == max of selected values
            kth = m
            if i + 1 < k:
                work = jnp.where(work >= m, NEG_INF, work)

        sel = alpha >= kth                                             # (1,T)
        e = jnp.where(sel, jnp.exp(alpha - mmax), 0.0)                 # (1,T)
        denom = jnp.sum(e, axis=1, keepdims=True)                      # (1,1)
        p = e * pl.reciprocal(denom, approx=True)                      # softmax
        attn_h = jnp.dot(p, hs_ref[...], preferred_element_type=f32)   # (1,H)
    else:
        # hidden is None -> attn_h = initial_h = h_prev (n_layers == 1)
        attn_h = h_prev

    # ---- score_net: Linear(Q + H -> 1) as two aligned lane reductions -----
    w_sc = w_sc_ref[...]                                               # (1,Q+H)
    pred = (jnp.sum(q * w_sc[:, 0:Q])
            + jnp.sum(attn_h * w_sc[:, Q:Q + H])
            + b_sc_ref[0])
    pred_ref[0, 0] = pred

    # ---- build GRU input x = cat([q*(s>=.5), q*(s<.5)]) --------------------
    s = pred if use_pred else score_ref[0]
    hi = (s >= 0.5).astype(f32)
    x = jnp.concatenate([q * hi, q * (1.0 - hi)], axis=1)              # (1,2Q)

    # ---- one GRU cell step (PyTorch gate order: r, z, n) -------------------
    # Packed, pre-transposed bf16 weights: rows [0,2Q) = w_ih^T, [2Q,2Q+H) =
    # w_hh^T.  bf16 feeds the MXU only; accumulation and gate math are f32.
    w_ih_t = w_gru_ref[0:2 * Q, :]                                     # (2Q,3H)
    w_hh_t = w_gru_ref[2 * Q:2 * Q + H, :]                             # (H, 3H)
    b = b_gru_ref[...]                                                 # (2, 3H)
    b_ih = b[0:1, :]
    b_hh = b[1:2, :]

    gi = jnp.dot(x.astype(bf16), w_ih_t, preferred_element_type=f32) + b_ih
    gh = jnp.dot(h_prev.astype(bf16), w_hh_t, preferred_element_type=f32) + b_hh

    r = jax.nn.sigmoid(gi[:, 0:H] + gh[:, 0:H])
    z = jax.nn.sigmoid(gi[:, H:2 * H] + gh[:, H:2 * H])
    n = jnp.tanh(gi[:, 2 * H:3 * H] + r * gh[:, 2 * H:3 * H])
    h_out_ref[...] = (1.0 - z) * n + z * h_prev


# --------------------------------------------------------------------------
# One-time weight packing (pre-transpose, bf16, fused biases)
# --------------------------------------------------------------------------
def pack_params(params):
    w_ih_t = params["w_ih"].T                                          # (2Q,3H)
    w_hh_t = params["w_hh"].T                                          # (H, 3H)
    w_gru = jnp.concatenate([w_ih_t, w_hh_t], axis=0).astype(jnp.bfloat16)
    b_gru = jnp.stack([params["b_ih"], params["b_hh"]], axis=0).astype(jnp.float32)
    return dict(
        initial_h=params["initial_h"],
        w_gru=w_gru,                                                   # (2Q+H,3H) bf16
        b_gru=b_gru,                                                   # (2, 3H)   f32
        w_score=params["w_score"],                                     # (1, Q+H)  f32
        b_score=params["b_score"],                                     # (1,)      f32
    )


# --------------------------------------------------------------------------
# Wrapper (glue: branching on hidden/score, reshapes, pallas_call)
# --------------------------------------------------------------------------
def eernn_pallas(packed, question, score, hidden, attn_k):
    f32 = jnp.float32
    Q = question.shape[0]
    H = packed["initial_h"].shape[0]

    use_attn = hidden is not None      # static -> baked into the kernel trace
    use_pred = score is None

    if hidden is None:
        questions_t = jnp.zeros((Q, 1), f32)
        hs = packed["initial_h"].reshape(1, H)
        h_prev = packed["initial_h"].reshape(1, H)
    else:
        questions, hs_stack = hidden                  # (T, Q), (T, 1, H)
        questions_t = questions.T.astype(f32)         # (Q, T) — lane-friendly
        hs = hs_stack.reshape(-1, H)
        h_prev = hs[-1:].reshape(1, H)

    score_arr = (jnp.zeros((1,), f32) if score is None
                 else jnp.asarray(score, f32).reshape(1))

    smem = pl.BlockSpec(memory_space=pltpu.MemorySpace.SMEM)
    vmem = pl.BlockSpec(memory_space=pltpu.MemorySpace.VMEM)

    pred, h_new = pl.pallas_call(
        functools.partial(_eernn_kernel, attn_k, use_attn, use_pred),
        out_shape=(jax.ShapeDtypeStruct((1, 1), f32),
                   jax.ShapeDtypeStruct((1, H), f32)),
        in_specs=[smem, smem,
                  vmem, vmem, vmem, vmem,
                  vmem, vmem, vmem],
        out_specs=(smem, vmem),
    )(score_arr, packed["b_score"],
      question.reshape(1, Q), questions_t, hs, h_prev,
      packed["w_score"], packed["w_gru"], packed["b_gru"])

    return pred[0, 0], h_new.reshape(1, 1, H)


# --------------------------------------------------------------------------
# Deterministic parameter init (shapes per the module's __init__, n_layers=1)
# --------------------------------------------------------------------------
def init_params(key, Q, H):
    k = 1.0 / math.sqrt(H)
    keys = jax.random.split(key, 6)
    u = lambda kk, shape: jax.random.uniform(kk, shape, jnp.float32, -k, k)
    return dict(
        initial_h=jnp.zeros((H,), jnp.float32),          # nn.Parameter(zeros)
        w_ih=u(keys[0], (3 * H, 2 * Q)),                 # GRU weight_ih_l0
        w_hh=u(keys[1], (3 * H, H)),                     # GRU weight_hh_l0
        b_ih=u(keys[2], (3 * H,)),
        b_hh=u(keys[3], (3 * H,)),
        w_score=u(keys[4], (1, Q + H)),                  # Linear(Q+H, 1)
        b_score=u(keys[5], (1,)),
    )


# --------------------------------------------------------------------------
# Pure-JAX reference (mirrors the PyTorch forward) for a sanity check
# --------------------------------------------------------------------------
def eernn_ref(params, question, score, hidden, attn_k):
    f32 = jnp.float32
    H = params["w_hh"].shape[1]
    if hidden is None:
        h_prev = params["initial_h"]
        attn_h = params["initial_h"]
    else:
        questions, hs_stack = hidden
        h_prev = hs_stack[-1, 0]
        alpha = questions @ question
        k = min(alpha.shape[0], attn_k)
        vals, idx = jax.lax.top_k(alpha, k)
        a = jax.nn.softmax(vals)
        attn_h = a @ hs_stack.reshape(-1, H)[idx]
    pred_v = jnp.concatenate([question, attn_h])
    pred = pred_v @ params["w_score"][0] + params["b_score"][0]
    s = pred if score is None else jnp.asarray(score, f32)
    x = jnp.concatenate([question * (s >= 0.5).astype(f32),
                         question * (s < 0.5).astype(f32)])
    gi = params["w_ih"] @ x + params["b_ih"]
    gh = params["w_hh"] @ h_prev + params["b_hh"]
    r = jax.nn.sigmoid(gi[:H] + gh[:H])
    z = jax.nn.sigmoid(gi[H:2 * H] + gh[H:2 * H])
    n = jnp.tanh(gi[2 * H:] + r * gh[2 * H:])
    h_new = (1.0 - z) * n + z * h_prev
    return pred, h_new.reshape(1, 1, H)


if __name__ == "__main__":
    QUES_SIZE, HIDDEN, T_HIST, ATTN_K = 128, 128, 8, 4   # lane-aligned, small

    key = jax.random.PRNGKey(0)
    pk, k1, k2, k3 = jax.random.split(key, 4)
    params = init_params(pk, QUES_SIZE, HIDDEN)
    packed = pack_params(params)                          # one-time packing

    question = jax.random.normal(k1, (QUES_SIZE,), jnp.float32)
    questions_hist = jax.random.normal(k2, (T_HIST, QUES_SIZE), jnp.float32)
    hs_hist = 0.1 * jax.random.normal(k3, (T_HIST, 1, HIDDEN), jnp.float32)
    score = jnp.float32(0.7)

    # main path: hidden provided (attention) + explicit score
    pred, h_new = eernn_pallas(packed, question, score,
                               (questions_hist, hs_hist), ATTN_K)
    jax.block_until_ready((pred, h_new))
    pred_r, h_r = eernn_ref(params, question, score,
                            (questions_hist, hs_hist), ATTN_K)
    assert np.allclose(np.asarray(pred), np.asarray(pred_r), atol=1e-2, rtol=1e-2)
    assert np.allclose(np.asarray(h_new), np.asarray(h_r), atol=1e-2, rtol=1e-2)

    # cold-start path: hidden is None, score is None (score := pred)
    pred0, h0 = eernn_pallas(packed, question, None, None, ATTN_K)
    jax.block_until_ready((pred0, h0))
    pred0_r, h0_r = eernn_ref(params, question, None, None, ATTN_K)
    assert np.allclose(np.asarray(pred0), np.asarray(pred0_r), atol=1e-2, rtol=1e-2)
    assert np.allclose(np.asarray(h0), np.asarray(h0_r), atol=1e-2, rtol=1e-2)

    print("KERNEL_OK")
</pallas_src>

<mosaic_0001>
module attributes {stable_mosaic.version = 11 : i64} {
  func.func @_eernn_kernel(%arg0: memref<1xf32, #tpu.memory_space<smem>>, %arg1: memref<1xf32, #tpu.memory_space<smem>>, %arg2: memref<1x128xf32, #tpu.memory_space<vmem>>, %arg3: memref<128x8xf32, #tpu.memory_space<vmem>>, %arg4: memref<8x128xf32, #tpu.memory_space<vmem>>, %arg5: memref<1x128xf32, #tpu.memory_space<vmem>>, %arg6: memref<1x256xf32, #tpu.memory_space<vmem>>, %arg7: memref<384x384xbf16, #tpu.memory_space<vmem>>, %arg8: memref<2x384xf32, #tpu.memory_space<vmem>>, %arg9: memref<1x1xf32, #tpu.memory_space<smem>>, %arg10: memref<1x128xf32, #tpu.memory_space<vmem>>) attributes {dimension_semantics = [], scalar_prefetch = 0 : i64, scratch_operands = 0 : i64, tpu.core_type = #tpu.core_type<tc>} {
    %c0 = arith.constant 0 : index
    %c0_0 = arith.constant 0 : index
    %0 = vector.load %arg2[%c0, %c0_0] : memref<1x128xf32, #tpu.memory_space<vmem>>, vector<1x128xf32>
    %c0_1 = arith.constant 0 : index
    %c0_2 = arith.constant 0 : index
    %1 = vector.load %arg5[%c0_1, %c0_2] : memref<1x128xf32, #tpu.memory_space<vmem>>, vector<1x128xf32>
    %c0_3 = arith.constant 0 : index
    %c0_4 = arith.constant 0 : index
    %2 = vector.load %arg3[%c0_3, %c0_4] : memref<128x8xf32, #tpu.memory_space<vmem>>, vector<128x8xf32>
    %cst = arith.constant dense<0.000000e+00> : vector<1x8xf32>
    %3 = tpu.matmul %0, %2, %cst {dimension_numbers = #tpu.dot_dimension_numbers<[1], [0], [0], [1], [0, 0, 1, 1], [], []>} : vector<1x128xf32>, vector<128x8xf32>, vector<1x8xf32> -> vector<1x8xf32>
    %4 = vector.shape_cast %3 : vector<1x8xf32> to vector<1x1x8xf32>
    %cst_5 = arith.constant dense<0xFF800000> : vector<1xf32>
    %5 = vector.multi_reduction <maximumf>, %4, %cst_5 [1, 2] : vector<1x1x8xf32> to vector<1xf32>
    %6 = vector.shape_cast %5 : vector<1xf32> to vector<1x1x1xf32>
    %7 = vector.extract %6[0, 0, 0] : f32 from vector<1x1x1xf32>
    %8 = vector.broadcast %7 : f32 to vector<1x8xf32>
    %9 = arith.cmpf oge, %3, %8 : vector<1x8xf32>
    %cst_6 = arith.constant 0xFF800000 : f32
    %10 = vector.broadcast %cst_6 : f32 to vector<1x8xf32>
    %11 = arith.select %9, %10, %3 : vector<1x8xi1>, vector<1x8xf32>
    %12 = vector.shape_cast %11 : vector<1x8xf32> to vector<1x1x8xf32>
    %cst_7 = arith.constant dense<0xFF800000> : vector<1xf32>
    %13 = vector.multi_reduction <maximumf>, %12, %cst_7 [1, 2] : vector<1x1x8xf32> to vector<1xf32>
    %14 = vector.shape_cast %13 : vector<1xf32> to vector<1x1x1xf32>
    %15 = vector.extract %14[0, 0, 0] : f32 from vector<1x1x1xf32>
    %16 = vector.broadcast %15 : f32 to vector<1x8xf32>
    %17 = arith.cmpf oge, %11, %16 : vector<1x8xf32>
    %cst_8 = arith.constant 0xFF800000 : f32
    %18 = vector.broadcast %cst_8 : f32 to vector<1x8xf32>
    %19 = arith.select %17, %18, %11 : vector<1x8xi1>, vector<1x8xf32>
    %20 = vector.shape_cast %19 : vector<1x8xf32> to vector<1x1x8xf32>
    %cst_9 = arith.constant dense<0xFF800000> : vector<1xf32>
    %21 = vector.multi_reduction <maximumf>, %20, %cst_9 [1, 2] : vector<1x1x8xf32> to vector<1xf32>
    %22 = vector.shape_cast %21 : vector<1xf32> to vector<1x1x1xf32>
    %23 = vector.extract %22[0, 0, 0] : f32 from vector<1x1x1xf32>
    %24 = vector.broadcast %23 : f32 to vector<1x8xf32>
    %25 = arith.cmpf oge, %19, %24 : vector<1x8xf32>
    %cst_10 = arith.constant 0xFF800000 : f32
    %26 = vector.broadcast %cst_10 : f32 to vector<1x8xf32>
    %27 = arith.select %25, %26, %19 : vector<1x8xi1>, vector<1x8xf32>
    %28 = vector.shape_cast %27 : vector<1x8xf32> to vector<1x1x8xf32>
    %cst_11 = arith.constant dense<0xFF800000> : vector<1xf32>
    %29 = vector.multi_reduction <maximumf>, %28, %cst_11 [1, 2] : vector<1x1x8xf32> to vector<1xf32>
    %30 = vector.shape_cast %29 : vector<1xf32> to vector<1x1x1xf32>
    %31 = vector.extract %30[0, 0, 0] : f32 from vector<1x1x1xf32>
    %32 = vector.broadcast %31 : f32 to vector<1x8xf32>
    %33 = arith.cmpf oge, %3, %32 : vector<1x8xf32>
    %34 = vector.broadcast %7 : f32 to vector<1x8xf32>
    %35 = arith.subf %3, %34 : vector<1x8xf32>
    %36 = math.exp %35 : vector<1x8xf32>
    %cst_12 = arith.constant 0.000000e+00 : f32
    %37 = vector.broadcast %cst_12 : f32 to vector<1x8xf32>
    %38 = arith.select %33, %36, %37 : vector<1x8xi1>, vector<1x8xf32>
    %cst_13 = arith.constant dense<0.000000e+00> : vector<1xf32>
    %39 = vector.multi_reduction <add>, %38, %cst_13 [1] : vector<1x8xf32> to vector<1xf32>
    %40 = vector.shape_cast %39 : vector<1xf32> to vector<1x1xf32>
    %41 = tpu.reciprocal %40 {approx = true} : vector<1x1xf32> -> vector<1x1xf32>
    %42 = vector.broadcast %41 : vector<1x1xf32> to vector<1x8xf32>
    %43 = arith.mulf %38, %42 : vector<1x8xf32>
    %c0_14 = arith.constant 0 : index
    %c0_15 = arith.constant 0 : index
    %44 = vector.load %arg4[%c0_14, %c0_15] : memref<8x128xf32, #tpu.memory_space<vmem>>, vector<8x128xf32>
    %cst_16 = arith.constant dense<0.000000e+00> : vector<1x128xf32>
    %45 = tpu.matmul %43, %44, %cst_16 {dimension_numbers = #tpu.dot_dimension_numbers<[1], [0], [0], [1], [0, 0, 1, 1], [], []>} : vector<1x8xf32>, vector<8x128xf32>, vector<1x128xf32> -> vector<1x128xf32>
    %c0_17 = arith.constant 0 : index
    %c0_18 = arith.constant 0 : index
    %46 = vector.load %arg6[%c0_17, %c0_18] : memref<1x256xf32, #tpu.memory_space<vmem>>, vector<1x256xf32>
    %47 = vector.extract_strided_slice %46 {offsets = [0, 0], sizes = [1, 128], strides = [1, 1]} : vector<1x256xf32> to vector<1x128xf32>
    %48 = arith.mulf %0, %47 : vector<1x128xf32>
    %49 = vector.shape_cast %48 : vector<1x128xf32> to vector<1x1x128xf32>
    %cst_19 = arith.constant dense<0.000000e+00> : vector<1xf32>
    %50 = vector.multi_reduction <add>, %49, %cst_19 [1, 2] : vector<1x1x128xf32> to vector<1xf32>
    %51 = vector.shape_cast %50 : vector<1xf32> to vector<1x1x1xf32>
    %52 = vector.extract %51[0, 0, 0] : f32 from vector<1x1x1xf32>
    %53 = vector.extract_strided_slice %46 {offsets = [0, 128], sizes = [1, 128], strides = [1, 1]} : vector<1x256xf32> to vector<1x128xf32>
    %54 = arith.mulf %45, %53 : vector<1x128xf32>
    %55 = vector.shape_cast %54 : vector<1x128xf32> to vector<1x1x128xf32>
    %cst_20 = arith.constant dense<0.000000e+00> : vector<1xf32>
    %56 = vector.multi_reduction <add>, %55, %cst_20 [1, 2] : vector<1x1x128xf32> to vector<1xf32>
    %57 = vector.shape_cast %56 : vector<1xf32> to vector<1x1x1xf32>
    %58 = vector.extract %57[0, 0, 0] : f32 from vector<1x1x1xf32>
    %59 = arith.addf %52, %58 : f32
    %c0_21 = arith.constant 0 : index
    %60 = memref.load %arg1[%c0_21] : memref<1xf32, #tpu.memory_space<smem>>
    %61 = arith.addf %59, %60 : f32
    %c0_22 = arith.constant 0 : index
    %c0_23 = arith.constant 0 : index
    %62 = memref.load %arg9[%c0_22, %c0_23] : memref<1x1xf32, #tpu.memory_space<smem>>
    memref.store %61, %arg9[%c0_22, %c0_23] : memref<1x1xf32, #tpu.memory_space<smem>>
    %c0_24 = arith.constant 0 : index
    %63 = memref.load %arg0[%c0_24] : memref<1xf32, #tpu.memory_space<smem>>
    %cst_25 = arith.constant 5.000000e-01 : f32
    %64 = arith.cmpf oge, %63, %cst_25 : f32
    %65 = arith.extui %64 : i1 to i32
    %66 = arith.sitofp %65 : i32 to f32
    %67 = vector.broadcast %66 : f32 to vector<1x128xf32>
    %68 = arith.mulf %0, %67 : vector<1x128xf32>
    %cst_26 = arith.constant 1.000000e+00 : f32
    %69 = arith.subf %cst_26, %66 : f32
    %70 = vector.broadcast %69 : f32 to vector<1x128xf32>
    %71 = arith.mulf %0, %70 : vector<1x128xf32>
    %72 = tpu.concatenate %68, %71 in 1 : vector<1x128xf32>, vector<1x128xf32> -> vector<1x256xf32>
    %c0_27 = arith.constant 0 : index
    %c0_28 = arith.constant 0 : index
    %73 = vector.load %arg7[%c0_27, %c0_28] : memref<384x384xbf16, #tpu.memory_space<vmem>>, vector<256x384xbf16>
    %c256 = arith.constant 256 : index
    %c0_29 = arith.constant 0 : index
    %74 = vector.load %arg7[%c256, %c0_29] : memref<384x384xbf16, #tpu.memory_space<vmem>>, vector<128x384xbf16>
    %c0_30 = arith.constant 0 : index
    %c0_31 = arith.constant 0 : index
    %75 = vector.load %arg8[%c0_30, %c0_31] : memref<2x384xf32, #tpu.memory_space<vmem>>, vector<2x384xf32>
    %76 = vector.extract_strided_slice %75 {offsets = [0, 0], sizes = [1, 384], strides = [1, 1]} : vector<2x384xf32> to vector<1x384xf32>
    %77 = vector.extract_strided_slice %75 {offsets = [1, 0], sizes = [1, 384], strides = [1, 1]} : vector<2x384xf32> to vector<1x384xf32>
    %78 = arith.truncf %72 : vector<1x256xf32> to vector<1x256xbf16>
    %cst_32 = arith.constant dense<0.000000e+00> : vector<1x384xf32>
    %79 = tpu.matmul %78, %73, %cst_32 {dimension_numbers = #tpu.dot_dimension_numbers<[1], [0], [0], [1], [0, 0, 1, 1], [], []>} : vector<1x256xbf16>, vector<256x384xbf16>, vector<1x384xf32> -> vector<1x384xf32>
    %80 = arith.addf %79, %76 : vector<1x384xf32>
    %81 = arith.truncf %1 : vector<1x128xf32> to vector<1x128xbf16>
    %cst_33 = arith.constant dense<0.000000e+00> : vector<1x384xf32>
    %82 = tpu.matmul %81, %74, %cst_33 {dimension_numbers = #tpu.dot_dimension_numbers<[1], [0], [0], [1], [0, 0, 1, 1], [], []>} : vector<1x128xbf16>, vector<128x384xbf16>, vector<1x384xf32> -> vector<1x384xf32>
    %83 = arith.addf %82, %77 : vector<1x384xf32>
    %84 = vector.extract_strided_slice %80 {offsets = [0, 0], sizes = [1, 128], strides = [1, 1]} : vector<1x384xf32> to vector<1x128xf32>
    %85 = vector.extract_strided_slice %83 {offsets = [0, 0], sizes = [1, 128], strides = [1, 1]} : vector<1x384xf32> to vector<1x128xf32>
    %86 = arith.addf %84, %85 : vector<1x128xf32>
    %87 = arith.negf %86 : vector<1x128xf32>
    %88 = math.exp %87 : vector<1x128xf32>
    %cst_34 = arith.constant 1.000000e+00 : f32
    %89 = vector.broadcast %cst_34 : f32 to vector<1x128xf32>
    %90 = arith.addf %89, %88 : vector<1x128xf32>
    %91 = arith.divf %89, %90 : vector<1x128xf32>
    %92 = vector.extract_strided_slice %80 {offsets = [0, 128], sizes = [1, 128], strides = [1, 1]} : vector<1x384xf32> to vector<1x128xf32>
    %93 = vector.extract_strided_slice %83 {offsets = [0, 128], sizes = [1, 128], strides = [1, 1]} : vector<1x384xf32> to vector<1x128xf32>
    %94 = arith.addf %92, %93 : vector<1x128xf32>
    %95 = arith.negf %94 : vector<1x128xf32>
    %96 = math.exp %95 : vector<1x128xf32>
    %cst_35 = arith.constant 1.000000e+00 : f32
    %97 = vector.broadcast %cst_35 : f32 to vector<1x128xf32>
    %98 = arith.addf %97, %96 : vector<1x128xf32>
    %99 = arith.divf %97, %98 : vector<1x128xf32>
    %100 = vector.extract_strided_slice %80 {offsets = [0, 256], sizes = [1, 128], strides = [1, 1]} : vector<1x384xf32> to vector<1x128xf32>
    %101 = vector.extract_strided_slice %83 {offsets = [0, 256], sizes = [1, 128], strides = [1, 1]} : vector<1x384xf32> to vector<1x128xf32>
    %102 = arith.mulf %91, %101 : vector<1x128xf32>
    %103 = arith.addf %100, %102 : vector<1x128xf32>
    %104 = math.tanh %103 : vector<1x128xf32>
    %cst_36 = arith.constant 1.000000e+00 : f32
    %105 = vector.broadcast %cst_36 : f32 to vector<1x128xf32>
    %106 = arith.subf %105, %99 : vector<1x128xf32>
    %107 = arith.mulf %106, %104 : vector<1x128xf32>
    %108 = arith.mulf %99, %1 : vector<1x128xf32>
    %109 = arith.addf %107, %108 : vector<1x128xf32>
    %c0_37 = arith.constant 0 : index
    %c0_38 = arith.constant 0 : index
    %110 = vector.load %arg10[%c0_37, %c0_38] : memref<1x128xf32, #tpu.memory_space<vmem>>, vector<1x128xf32>
    tpu.vector_store %arg10[%c0_37, %c0_38], %109 {strides = array<i32>} : memref<1x128xf32, #tpu.memory_space<vmem>>, vector<1x128xf32>,
    return
  }
}

</mosaic_0001>

<llo_original>
// kernel: tpu_custom_call.1
$region0: #{tpu_custom_call.1}
  #allocation0 [shape = 'u32[]', space=smem, size = 0x4, offset = 0x4, fixed_abs, tag = 'smem constant byte address 0x4 - core index']
  #allocation1 [shape = 'u32[144,128]{1,0:T(1,128)}', space=vmem, size = 0x12000, scoped, tag = 'internal scratch']
  #allocation2 [shape = 'f32[1]{0:T(128)S(6)}', space=smem, size = 0x200, scoped, tag = 'scoped memory for tpu_custom_call.1']
  #allocation3 [shape = 'f32[1]{0:T(128)S(6)}', space=smem, size = 0x200, scoped, tag = 'scoped memory for tpu_custom_call.1']
  %s0 = inlined_call_operand.<no memory space> [shape: f32[1], index: 0, kind: input, shape index: {}]
  %s1 = inlined_call_operand.<no memory space> [shape: f32[1], index: 1, kind: input, shape index: {}]
  %s2 = inlined_call_operand.vmem [shape: f32[1,128], index: 2, kind: input, shape index: {}]
  %s3 = inlined_call_operand.vmem [shape: f32[128,8], index: 3, kind: input, shape index: {}]
  %s4 = inlined_call_operand.vmem [shape: f32[8,128], index: 4, kind: input, shape index: {}]
  %s5 = inlined_call_operand.vmem [shape: f32[1,128], index: 5, kind: input, shape index: {}]
  %s6 = inlined_call_operand.vmem [shape: f32[1,256], index: 6, kind: input, shape index: {}]
  %s7 = inlined_call_operand.hbm [shape: bf16[384,384], index: 7, kind: input, shape index: {}]
  %s8 = inlined_call_operand.vmem [shape: f32[2,384], index: 8, kind: input, shape index: {}]
  %s9 = inlined_call_operand.hbm [shape: f32[1,1], index: 9, kind: output, shape index: {0}]
  %s10 = inlined_call_operand.hbm [shape: f32[1,128], index: 10, kind: output, shape index: {1}]
  %11 = xla_tuple %s9, %s10
  %s12 = sld [smem:[#allocation0]]
  $region58: #{tpu_custom_call.1} parent=0
    _
  %s14 = ssub.s32 1, %s12
  %s15 = scalar_select 0, %s14, %s12
  %16 = sst [smem:[#allocation2]] %s0
  %17 = sst [smem:[#allocation3]] %s1
  $region1: #{tpu_custom_call.1} parent=0
    #allocation4 [shape = 'u8[294912]{0}', space=vmem, size = 0x48000, scoped, tag = 'input window, operand 7, single buffered']
    #allocation5 [shape = 's32[1]{0}', space=sflag, size = 0x4, scoped, tag = 'scoped memory for tpu_custom_call.1']
    #allocation6 [shape = 's32[1]{0}', space=sflag, size = 0x4, scoped, tag = 'scoped memory for tpu_custom_call.1']
    #allocation7 [shape = 's32[1]{0}', space=sflag, size = 0x4, scoped, tag = 'scoped memory for tpu_custom_call.1']
    #allocation8 [shape = 'u8[512]{0}', space=smem, size = 0x200, scoped, tag = 'output window, operand 0, single buffered']
    #allocation9 [shape = 'u8[512]{0}', space=vmem, size = 0x400, scoped, tag = 'output window, operand 1, single buffered']
    %18 = vsyncpa [#allocation5], 0
    %19 = vsyncpa [#allocation7], 0
    %20 = vsyncpa [#allocation6], 0
    // Predicated region
    $region2: #{tpu_custom_call.1} parent=1 // pred_check
      _
    $region3: #{tpu_custom_call.1} parent=1 // pred_check_branch
      %22 = sbr.rel (0) target = $region5
    $region4: #{tpu_custom_call.1} parent=1 // pred_region
      _
    $region5: #{tpu_custom_call.1} parent=1 // pred_fallthru
      _
    // Predicated region
    $region6: #{tpu_custom_call.1} parent=1 // pred_check
      _
    $region7: #{tpu_custom_call.1} parent=1 // pred_check_branch
      %24 = sbr.rel (0) target = $region9
    $region8: #{tpu_custom_call.1} parent=1 // pred_region
      _
    $region9: #{tpu_custom_call.1} parent=1 // pred_fallthru
      _
    // Predicated region
    $region10: #{tpu_custom_call.1} parent=1 // pred_check
      _
    $region11: #{tpu_custom_call.1} parent=1 // pred_check_branch
      %26 = sbr.rel (0) target = $region13
    $region12: #{tpu_custom_call.1} parent=1 // pred_region
      _
    $region13: #{tpu_custom_call.1} parent=1 // pred_fallthru
      _
    // Predicated region
    $region14: #{tpu_custom_call.1} parent=1 // pred_check
      _
    $region15: #{tpu_custom_call.1} parent=1 // pred_check_branch
      %28 = sbr.rel (0) target = $region17
    $region16: #{tpu_custom_call.1} parent=1 // pred_region
      _
    $region17: #{tpu_custom_call.1} parent=1 // pred_fallthru
      _
    // Predicated region
    $region18: #{tpu_custom_call.1} parent=1 // pred_check
      _
    $region19: #{tpu_custom_call.1} parent=1 // pred_check_branch
      %30 = sbr.rel (0) target = $region21
    $region20: #{tpu_custom_call.1} parent=1 // pred_region
      _
    $region21: #{tpu_custom_call.1} parent=1 // pred_fallthru
      _
    // Predicated region
    $region22: #{tpu_custom_call.1} parent=1 // pred_check
      _
    $region23: #{tpu_custom_call.1} parent=1 // pred_check_branch
      %32 = sbr.rel (0) target = $region25
    $region24: #{tpu_custom_call.1} parent=1 // pred_region
      _
    $region25: #{tpu_custom_call.1} parent=1 // pred_fallthru
      _
    // Predicated region
    $region26: #{tpu_custom_call.1} parent=1 // pred_check
      _
    $region27: #{tpu_custom_call.1} parent=1 // pred_check_branch
      %34 = sbr.rel (0) target = $region29
    $region28: #{tpu_custom_call.1} parent=1 // pred_region
      _
    $region29: #{tpu_custom_call.1} parent=1 // pred_fallthru
      _
    // Predicated region
    $region30: #{tpu_custom_call.1} parent=1 // pred_check
      _
    $region31: #{tpu_custom_call.1} parent=1 // pred_check_branch
      %36 = sbr.rel (0) target = $region33
    $region32: #{tpu_custom_call.1} parent=1 // pred_region
      %s38 = ssub.s32 9216, 9216
      %39 = vsyncadd [#allocation5], %s38
      %s40 = sshll.u32 [#allocation4], 4
      %s41 = int_to_ptr.vmem [resolvable:$true] %s40
      %46 = dma.hbm_to_vmem [thread:$0]  %s7, 9216, %s41, [#allocation5], 192, 192, 12
    $region33: #{tpu_custom_call.1} parent=1 // pred_fallthru
      _
    // Predicated region
    $region34: #{tpu_custom_call.1} parent=1 // pred_check
      _
    $region35: #{tpu_custom_call.1} parent=1 // pred_check_branch
      %48 = sbr.rel (0) target = $region37
    $region36: #{tpu_custom_call.1} parent=1 // pred_region
      _
    $region37: #{tpu_custom_call.1} parent=1 // pred_fallthru
      _
    // Predicated region
    $region38: #{tpu_custom_call.1} parent=1 // pred_check
      _
    $region39: #{tpu_custom_call.1} parent=1 // pred_check_branch
      %50 = sbr.rel (0) target = $region41
    $region40: #{tpu_custom_call.1} parent=1 // pred_region
      %51 = dma.done [#allocation5], 9216
    $region41: #{tpu_custom_call.1} parent=1 // pred_fallthru
      _
    %v53 = vld [vmem:[%s2] sm:$0x1]
    %v54 = vld [vmem:[%s5] sm:$0x1]
    %v55 = vld [vmem:[%s3] sm:$0xff]
    %v56 = vld [vmem:[%s3 + $0x8] sm:$0xff]
    %v57 = vld [vmem:[%s3 + $0x10] sm:$0xff]
    %v58 = vld [vmem:[%s3 + $0x18] sm:$0xff]
    %v59 = vld [vmem:[%s3 + $0x20] sm:$0xff]
    %v60 = vld [vmem:[%s3 + $0x28] sm:$0xff]
    %v61 = vld [vmem:[%s3 + $0x30] sm:$0xff]
    %v62 = vld [vmem:[%s3 + $0x38] sm:$0xff]
    %v63 = vld [vmem:[%s3 + $0x40] sm:$0xff]
    %v64 = vld [vmem:[%s3 + $0x48] sm:$0xff]
    %v65 = vld [vmem:[%s3 + $0x50] sm:$0xff]
    %v66 = vld [vmem:[%s3 + $0x58] sm:$0xff]
    %v67 = vld [vmem:[%s3 + $0x60] sm:$0xff]
    %v68 = vld [vmem:[%s3 + $0x68] sm:$0xff]
    %v69 = vld [vmem:[%s3 + $0x70] sm:$0xff]
    %v70 = vld [vmem:[%s3 + $0x78] sm:$0xff]
    %71 = vmatprep.subr.mxu0 0.0
    %72 = vmatpush1.msra.mxu0 %v55
    %73 = vmatprep.subr.mxu0 0.0
    %74 = vmatpush1.msra.mxu0 %v56
    %75 = vmatprep.subr.mxu0 0.0
    %76 = vmatpush1.msra.mxu0 %v57
    %77 = vmatprep.subr.mxu0 0.0
    %78 = vmatpush1.msra.mxu0 %v58
    %79 = vmatprep.subr.mxu0 0.0
    %80 = vmatpush1.msra.mxu0 %v59
    %81 = vmatprep.subr.mxu0 0.0
    %82 = vmatpush1.msra.mxu0 %v60
    %83 = vmatprep.subr.mxu0 0.0
    %84 = vmatpush1.msra.mxu0 %v61
    %85 = vmatprep.subr.mxu0 0.0
    %86 = vmatpush1.msra.mxu0 %v62
    %87 = vmatprep.subr.mxu0 0.0
    %88 = vmatpush1.msra.mxu0 %v63
    %89 = vmatprep.subr.mxu0 0.0
    %90 = vmatpush1.msra.mxu0 %v64
    %91 = vmatprep.subr.mxu0 0.0
    %92 = vmatpush1.msra.mxu0 %v65
    %93 = vmatprep.subr.mxu0 0.0
    %94 = vmatpush1.msra.mxu0 %v66
    %95 = vmatprep.subr.mxu0 0.0
    %96 = vmatpush1.msra.mxu0 %v67
    %97 = vmatprep.subr.mxu0 0.0
    %98 = vmatpush1.msra.mxu0 %v68
    %99 = vmatprep.subr.mxu0 0.0
    %100 = vmatpush1.msra.mxu0 %v69
    %101 = vmatprep.subr.mxu0 0.0
    %102 = vmatpush1.msra.mxu0 %v70
    %103 = vmatprep.subr.mxu0 0.0
    %104 = vmatpush1.msra.mxu0 0.0
    %105 = vmatprep.subr.mxu0 0.0
    %106 = vmatpush1.msra.mxu0 0.0
    %107 = vmatprep.subr.mxu0 0.0
    %108 = vmatpush1.msra.mxu0 0.0
    %109 = vmatprep.subr.mxu0 0.0
    %110 = vmatpush1.msra.mxu0 0.0
    %111 = vmatprep.subr.mxu0 0.0
    %112 = vmatpush1.msra.mxu0 0.0
    %113 = vmatprep.subr.mxu0 0.0
    %114 = vmatpush1.msra.mxu0 0.0
    %115 = vmatprep.subr.mxu0 0.0
    %116 = vmatpush1.msra.mxu0 0.0
    %117 = vmatprep.subr.mxu0 0.0
    %118 = vmatpush1.msra.mxu0 0.0
    %119 = vmatprep.subr.mxu0 0.0
    %120 = vmatpush1.msra.mxu0 0.0
    %121 = vmatprep.subr.mxu0 0.0
    %122 = vmatpush1.msra.mxu0 0.0
    %123 = vmatprep.subr.mxu0 0.0
    %124 = vmatpush1.msra.mxu0 0.0
    %125 = vmatprep.subr.mxu0 0.0
    %126 = vmatpush1.msra.mxu0 0.0
    %127 = vmatprep.subr.mxu0 0.0
    %128 = vmatpush1.msra.mxu0 0.0
    %129 = vmatprep.subr.mxu0 0.0
    %130 = vmatpush1.msra.mxu0 0.0
    %131 = vmatprep.subr.mxu0 0.0
    %132 = vmatpush1.msra.mxu0 0.0
    %133 = vmatprep.subr.mxu0 0.0
    %134 = vmatpush1.msra.mxu0 0.0
    %135 = vmatprep.mubr.f32.mxu0 0.0
    %136 = vmatmul.mubr.f32.gmra.mrb[0].mxu0 %v53
    %v137 = vpop.f32.mrb[0].mxu0
    %v138 = vadd.f32 0.0, %v137
    %v139 = vpop.f32.mrb[0].mxu0
    %140 = vdwg.mxu0
    %vm141 = vcmask 57344
    %v142 = vsel %vm141, %v138, -inf
    %143 = vmax.xlane.f32.xlu0 %v142
    %v144 = vpop.xlane.xlu0 %143
    %v145 = vrot.slane %v144, 4
    %v146 = vmax.f32 %v144, %v145
    %v147 = vrot.slane %v146, 2
    %v148 = vmax.f32 %v146, %v147
    %v149 = vrot.slane %v148, 1
    %v150 = vmax.f32 %v148, %v149
    %s151 = vtos %v150
    %v152 = vstv %s151
    %vm153 = vcmp.ge.f32.partialorder %v138, %v152
    %v154 = vsel %vm153, -inf, %v138
    %v155 = vsel %vm141, %v154, -inf
    %156 = vmax.xlane.f32.xlu0 %v155
    %v157 = vpop.xlane.xlu0 %156
    %v158 = vrot.slane %v157, 4
    %v159 = vmax.f32 %v157, %v158
    %v160 = vrot.slane %v159, 2
    %v161 = vmax.f32 %v159, %v160
    %v162 = vrot.slane %v161, 1
    %v163 = vmax.f32 %v161, %v162
    %s164 = vtos %v163
    %v165 = vstv %s164
    %vm166 = vcmp.ge.f32.partialorder %v154, %v165
    %v167 = vsel %vm166, -inf, %v154
    %v168 = vsel %vm141, %v167, -inf
    %169 = vmax.xlane.f32.xlu0 %v168
    %v170 = vpop.xlane.xlu0 %169
    %v171 = vrot.slane %v170, 4
    %v172 = vmax.f32 %v170, %v171
    %v173 = vrot.slane %v172, 2
    %v174 = vmax.f32 %v172, %v173
    %v175 = vrot.slane %v174, 1
    %v176 = vmax.f32 %v174, %v175
    %s177 = vtos %v176
    %v178 = vstv %s177
    %vm179 = vcmp.ge.f32.partialorder %v167, %v178
    %v180 = vsel %vm179, -inf, %v167
    %v181 = vsel %vm141, %v180, -inf
    %182 = vmax.xlane.f32.xlu0 %v181
    %v183 = vpop.xlane.xlu0 %182
    %v184 = vrot.slane %v183, 4
    %v185 = vmax.f32 %v183, %v184
    %v186 = vrot.slane %v185, 2
    %v187 = vmax.f32 %v185, %v186
    %v188 = vrot.slane %v187, 1
    %v189 = vmax.f32 %v187, %v188
    %s190 = vtos %v189
    %v191 = vstv %s190
    %vm192 = vcmp.ge.f32.partialorder %v138, %v191
    %v193 = vsub.f32 %v138, %v152
    %v194 = vmul.f32 %v193, 1.442695
    %v195 = vpow.pop %v194
    %v196 = vsel %vm192, %v195, 0.0
    %v197 = vsel %vm141, %v196, 0.0
    %198 = vadd.xlane.f32.xlu0 %v197
    %v199 = vpop.xlane.xlu0 %198
    %v200 = vrcp.pop %v199
    %v201 = vmul.f32 %v196, %v200
    %v202 = vld [vmem:[%s4] sm:$0xff]
    %vm203 = vcmask 64512
    %v205 = vsel %vm203, %v201, 0
    %207 = vmatprep.subr.mxu0 0.0
    %208 = vmatpush1.msra.mxu0 %v202
    %209 = vmatprep.subr.mxu0 0.0
    %210 = vmatpush1.msra.mxu0 0.0
    %211 = vmatprep.subr.mxu0 0.0
    %212 = vmatpush1.msra.mxu0 0.0
    %213 = vmatprep.subr.mxu0 0.0
    %214 = vmatpush1.msra.mxu0 0.0
    %215 = vmatprep.subr.mxu0 0.0
    %216 = vmatpush1.msra.mxu0 0.0
    %217 = vmatprep.subr.mxu0 0.0
    %218 = vmatpush1.msra.mxu0 0.0
    %219 = vmatprep.subr.mxu0 0.0
    %220 = vmatpush1.msra.mxu0 0.0
    %221 = vmatprep.subr.mxu0 0.0
    %222 = vmatpush1.msra.mxu0 0.0
    %223 = vmatprep.subr.mxu0 0.0
    %224 = vmatpush1.msra.mxu0 0.0
    %225 = vmatprep.subr.mxu0 0.0
    %226 = vmatpush1.msra.mxu0 0.0
    %227 = vmatprep.subr.mxu0 0.0
    %228 = vmatpush1.msra.mxu0 0.0
    %229 = vmatprep.subr.mxu0 0.0
    %230 = vmatpush1.msra.mxu0 0.0
    %231 = vmatprep.subr.mxu0 0.0
    %232 = vmatpush1.msra.mxu0 0.0
    %233 = vmatprep.subr.mxu0 0.0
    %234 = vmatpush1.msra.mxu0 0.0
    %235 = vmatprep.subr.mxu0 0.0
    %236 = vmatpush1.msra.mxu0 0.0
    %237 = vmatprep.subr.mxu0 0.0
    %238 = vmatpush1.msra.mxu0 0.0
    %239 = vmatprep.subr.mxu0 0.0
    %240 = vmatpush1.msra.mxu0 0.0
    %241 = vmatprep.subr.mxu0 0.0
    %242 = vmatpush1.msra.mxu0 0.0
    %243 = vmatprep.subr.mxu0 0.0
    %244 = vmatpush1.msra.mxu0 0.0
    %245 = vmatprep.subr.mxu0 0.0
    %246 = vmatpush1.msra.mxu0 0.0
    %247 = vmatprep.subr.mxu0 0.0
    %248 = vmatpush1.msra.mxu0 0.0
    %249 = vmatprep.subr.mxu0 0.0
    %250 = vmatpush1.msra.mxu0 0.0
    %251 = vmatprep.subr.mxu0 0.0
    %252 = vmatpush1.msra.mxu0 0.0
    %253 = vmatprep.subr.mxu0 0.0
    %254 = vmatpush1.msra.mxu0 0.0
    %255 = vmatprep.subr.mxu0 0.0
    %256 = vmatpush1.msra.mxu0 0.0
    %257 = vmatprep.subr.mxu0 0.0
    %258 = vmatpush1.msra.mxu0 0.0
    %259 = vmatprep.subr.mxu0 0.0
    %260 = vmatpush1.msra.mxu0 0.0
    %261 = vmatprep.subr.mxu0 0.0
    %262 = vmatpush1.msra.mxu0 0.0
    %263 = vmatprep.subr.mxu0 0.0
    %264 = vmatpush1.msra.mxu0 0.0
    %265 = vmatprep.subr.mxu0 0.0
    %266 = vmatpush1.msra.mxu0 0.0
    %267 = vmatprep.subr.mxu0 0.0
    %268 = vmatpush1.msra.mxu0 0.0
    %269 = vmatprep.subr.mxu0 0.0
    %270 = vmatpush1.msra.mxu0 0.0
    %271 = vmatprep.mubr.f32.mxu0 0.0
    %272 = vmatmul.mubr.f32.gmra.mrb[0].mxu0 %v205
    %v273 = vpop.f32.mrb[0].mxu0
    %v274 = vadd.f32 0.0, %v273
    %v275 = vpop.f32.mrb[0].mxu0
    %276 = vdwg.mxu0
    %v277 = vld [vmem:[%s6] sm:$0x3]
    %v278 = vmul.f32 %v53, %v277
    %vm279 = vcmask 1040384
    %v280 = vsel %vm279, %v278, 0.0
    %281 = vadd.xlane.f32.xlu0 %v280
    %v282 = vpop.xlane.xlu0 %281
    %v283 = vrot.slane %v282, 4
    %v284 = vadd.f32 %v282, %v283
    %v285 = vrot.slane %v284, 2
    %v286 = vadd.f32 %v284, %v285
    %v287 = vrot.slane %v286, 1
    %v288 = vadd.f32 %v286, %v287
    %s289 = vtos %v288
    %v291 = vlaneseq
    %v292 = vshrl.u32 %v291, 7
    %v293 = vsub.s32 1, %v292
    %v294 = vrot.slane %v277, %v293
    %v296 = vmul.f32 %v274, %v294
    %v297 = vsel %vm279, %v296, 0.0
    %298 = vadd.xlane.f32.xlu0 %v297
    %v299 = vpop.xlane.xlu0 %298
    %v300 = vrot.slane %v299, 4
    %v301 = vadd.f32 %v299, %v300
    %v302 = vrot.slane %v301, 2
    %v303 = vadd.f32 %v301, %v302
    %v304 = vrot.slane %v303, 1
    %v305 = vadd.f32 %v303, %v304
    %s306 = vtos %v305
    %s307 = sadd.f32 %s289, %s306
    %s308 = sld [smem:[#allocation3]]
    %s309 = sadd.f32 %s307, %s308
    %s310 = scalar_lea.smem [#allocation8], 0
    %311 = sst [smem:[%s310]] %s309
    %s312 = sld [smem:[#allocation2]]
    %p313 = scmp.ge.f32.partialorder %s312, 0.5
    %s314 = scalar_select %p313, 1, 0
    %s315 = scvt.s32.f32 %s314
    %v316 = vstv %s315
    %v317 = vmul.f32 %v53, %v316
    %s318 = ssub.f32 1.0, %s315
    %v319 = vstv %s318
    %v320 = vmul.f32 %v53, %v319
    %v321 = vld [vmem:[#allocation4] sm:$0xff]
    %v322 = vld [vmem:[#allocation4 + $0x8] sm:$0xf]
    %v323 = vld [vmem:[#allocation4 + $0xc] sm:$0xff]
    %v324 = vld [vmem:[#allocation4 + $0x14] sm:$0xf]
    %v325 = vld [vmem:[#allocation4 + $0x18] sm:$0xff]
    %v326 = vld [vmem:[#allocation4 + $0x20] sm:$0xf]
    %v327 = vld [vmem:[#allocation4 + $0x24] sm:$0xff]
    %v328 = vld [vmem:[#allocation4 + $0x2c] sm:$0xf]
    %v329 = vld [vmem:[#allocation4 + $0x30] sm:$0xff]
    %v330 = vld [vmem:[#allocation4 + $0x38] sm:$0xf]
    %v331 = vld [vmem:[#allocation4 + $0x3c] sm:$0xff]
    %v332 = vld [vmem:[#allocation4 + $0x44] sm:$0xf]
    %v333 = vld [vmem:[#allocation4 + $0x48] sm:$0xff]
    %v334 = vld [vmem:[#allocation4 + $0x50] sm:$0xf]
    %v335 = vld [vmem:[#allocation4 + $0x54] sm:$0xff]
    %v336 = vld [vmem:[#allocation4 + $0x5c] sm:$0xf]
    %v337 = vld [vmem:[#allocation4 + $0x60] sm:$0xff]
    %v338 = vld [vmem:[#allocation4 + $0x68] sm:$0xf]
    %v339 = vld [vmem:[#allocation4 + $0x6c] sm:$0xff]
    %v340 = vld [vmem:[#allocation4 + $0x74] sm:$0xf]
    %v341 = vld [vmem:[#allocation4 + $0x78] sm:$0xff]
    %v342 = vld [vmem:[#allocation4 + $0x80] sm:$0xf]
    %v343 = vld [vmem:[#allocation4 + $0x84] sm:$0xff]
    %v344 = vld [vmem:[#allocation4 + $0x8c] sm:$0xf]
    %v345 = vld [vmem:[#allocation4 + $0x90] sm:$0xff]
    %v346 = vld [vmem:[#allocation4 + $0x98] sm:$0xf]
    %v347 = vld [vmem:[#allocation4 + $0x9c] sm:$0xff]
    %v348 = vld [vmem:[#allocation4 + $0xa4] sm:$0xf]
    %v349 = vld [vmem:[#allocation4 + $0xa8] sm:$0xff]
    %v350 = vld [vmem:[#allocation4 + $0xb0] sm:$0xf]
    %v351 = vld [vmem:[#allocation4 + $0xb4] sm:$0xff]
    %v352 = vld [vmem:[#allocation4 + $0xbc] sm:$0xf]
    %v353 = vld [vmem:[#allocation4 + $0xc0] sm:$0xff]
    %v354 = vld [vmem:[#allocation4 + $0xc8] sm:$0xf]
    %v355 = vld [vmem:[#allocation4 + $0xcc] sm:$0xff]
    %v356 = vld [vmem:[#allocation4 + $0xd4] sm:$0xf]
    %v357 = vld [vmem:[#allocation4 + $0xd8] sm:$0xff]
    %v358 = vld [vmem:[#allocation4 + $0xe0] sm:$0xf]
    %v359 = vld [vmem:[#allocation4 + $0xe4] sm:$0xff]
    %v360 = vld [vmem:[#allocation4 + $0xec] sm:$0xf]
    %v361 = vld [vmem:[#allocation4 + $0xf0] sm:$0xff]
    %v362 = vld [vmem:[#allocation4 + $0xf8] sm:$0xf]
    %v363 = vld [vmem:[#allocation4 + $0xfc] sm:$0xff]
    %v364 = vld [vmem:[#allocation4 + $0x104] sm:$0xf]
    %v365 = vld [vmem:[#allocation4 + $0x108] sm:$0xff]
    %v366 = vld [vmem:[#allocation4 + $0x110] sm:$0xf]
    %v367 = vld [vmem:[#allocation4 + $0x114] sm:$0xff]
    %v368 = vld [vmem:[#allocation4 + $0x11c] sm:$0xf]
    %v369 = vld [vmem:[#allocation4 + $0x120] sm:$0xff]
    %v370 = vld [vmem:[#allocation4 + $0x128] sm:$0xf]
    %v371 = vld [vmem:[#allocation4 + $0x12c] sm:$0xff]
    %v372 = vld [vmem:[#allocation4 + $0x134] sm:$0xf]
    %v373 = vld [vmem:[#allocation4 + $0x138] sm:$0xff]
    %v374 = vld [vmem:[#allocation4 + $0x140] sm:$0xf]
    %v375 = vld [vmem:[#allocation4 + $0x144] sm:$0xff]
    %v376 = vld [vmem:[#allocation4 + $0x14c] sm:$0xf]
    %v377 = vld [vmem:[#allocation4 + $0x150] sm:$0xff]
    %v378 = vld [vmem:[#allocation4 + $0x158] sm:$0xf]
    %v379 = vld [vmem:[#allocation4 + $0x15c] sm:$0xff]
    %v380 = vld [vmem:[#allocation4 + $0x164] sm:$0xf]
    %v381 = vld [vmem:[#allocation4 + $0x168] sm:$0xff]
    %v382 = vld [vmem:[#allocation4 + $0x170] sm:$0xf]
    %v383 = vld [vmem:[#allocation4 + $0x174] sm:$0xff]
    %v384 = vld [vmem:[#allocation4 + $0x17c] sm:$0xf]
    %v385 = vld [vmem:[#allocation4 + $0x180] sm:$0xff]
    %v386 = vld [vmem:[#allocation4 + $0x188] sm:$0xf]
    %v387 = vld [vmem:[#allocation4 + $0x18c] sm:$0xff]
    %v388 = vld [vmem:[#allocation4 + $0x194] sm:$0xf]
    %v389 = vld [vmem:[#allocation4 + $0x198] sm:$0xff]
    %v390 = vld [vmem:[#allocation4 + $0x1a0] sm:$0xf]
    %v391 = vld [vmem:[#allocation4 + $0x1a4] sm:$0xff]
    %v392 = vld [vmem:[#allocation4 + $0x1ac] sm:$0xf]
    %v393 = vld [vmem:[#allocation4 + $0x1b0] sm:$0xff]
    %v394 = vld [vmem:[#allocation4 + $0x1b8] sm:$0xf]
    %v395 = vld [vmem:[#allocation4 + $0x1bc] sm:$0xff]
    %v396 = vld [vmem:[#allocation4 + $0x1c4] sm:$0xf]
    %v397 = vld [vmem:[#allocation4 + $0x1c8] sm:$0xff]
    %v398 = vld [vmem:[#allocation4 + $0x1d0] sm:$0xf]
    %v399 = vld [vmem:[#allocation4 + $0x1d4] sm:$0xff]
    %v400 = vld [vmem:[#allocation4 + $0x1dc] sm:$0xf]
    %v401 = vld [vmem:[#allocation4 + $0x1e0] sm:$0xff]
    %v402 = vld [vmem:[#allocation4 + $0x1e8] sm:$0xf]
    %v403 = vld [vmem:[#allocation4 + $0x1ec] sm:$0xff]
    %v404 = vld [vmem:[#allocation4 + $0x1f4] sm:$0xf]
    %v405 = vld [vmem:[#allocation4 + $0x1f8] sm:$0xff]
    %v406 = vld [vmem:[#allocation4 + $0x200] sm:$0xf]
    %v407 = vld [vmem:[#allocation4 + $0x204] sm:$0xff]
    %v408 = vld [vmem:[#allocation4 + $0x20c] sm:$0xf]
    %v409 = vld [vmem:[#allocation4 + $0x210] sm:$0xff]
    %v410 = vld [vmem:[#allocation4 + $0x218] sm:$0xf]
    %v411 = vld [vmem:[#allocation4 + $0x21c] sm:$0xff]
    %v412 = vld [vmem:[#allocation4 + $0x224] sm:$0xf]
    %v413 = vld [vmem:[#allocation4 + $0x228] sm:$0xff]
    %v414 = vld [vmem:[#allocation4 + $0x230] sm:$0xf]
    %v415 = vld [vmem:[#allocation4 + $0x234] sm:$0xff]
    %v416 = vld [vmem:[#allocation4 + $0x23c] sm:$0xf]
    %v417 = vld [vmem:[%s8] sm:$0x3f]
    %v418 = vpack.c.bf16 %v317, %v317
    %v419 = vpack.c.bf16 %v320, %v320
    %v484 = vunpack.c.l.b16 %v321
    %v485 = vunpack.c.h.b16 %v321
    %v486 = vunpack.c.l.b16 %v322
    %v487 = vunpack.c.l.b16 %v323
    %v488 = vunpack.c.h.b16 %v323
    %v489 = vunpack.c.l.b16 %v324
    %v490 = vunpack.c.l.b16 %v325
    %v491 = vunpack.c.h.b16 %v325
    %v492 = vunpack.c.l.b16 %v326
    %v493 = vunpack.c.l.b16 %v327
    %v494 = vunpack.c.h.b16 %v327
    %v495 = vunpack.c.l.b16 %v328
    %v496 = vunpack.c.l.b16 %v329
    %v497 = vunpack.c.h.b16 %v329
    %v498 = vunpack.c.l.b16 %v330
    %v499 = vunpack.c.l.b16 %v331
    %v500 = vunpack.c.h.b16 %v331
    %v501 = vunpack.c.l.b16 %v332
    %v502 = vunpack.c.l.b16 %v333
    %v503 = vunpack.c.h.b16 %v333
    %v504 = vunpack.c.l.b16 %v334
    %v505 = vunpack.c.l.b16 %v335
    %v506 = vunpack.c.h.b16 %v335
    %v507 = vunpack.c.l.b16 %v336
    %v508 = vunpack.c.l.b16 %v337
    %v509 = vunpack.c.h.b16 %v337
    %v510 = vunpack.c.l.b16 %v338
    %v511 = vunpack.c.l.b16 %v339
    %v512 = vunpack.c.h.b16 %v339
    %v513 = vunpack.c.l.b16 %v340
    %v514 = vunpack.c.l.b16 %v341
    %v515 = vunpack.c.h.b16 %v341
    %v516 = vunpack.c.l.b16 %v342
    %v517 = vunpack.c.l.b16 %v343
    %v518 = vunpack.c.h.b16 %v343
    %v519 = vunpack.c.l.b16 %v344
    %v520 = vunpack.c.l.b16 %v345
    %v521 = vunpack.c.h.b16 %v345
    %v522 = vunpack.c.l.b16 %v346
    %v523 = vunpack.c.l.b16 %v347
    %v524 = vunpack.c.h.b16 %v347
    %v525 = vunpack.c.l.b16 %v348
    %v526 = vunpack.c.l.b16 %v349
    %v527 = vunpack.c.h.b16 %v349
    %v528 = vunpack.c.l.b16 %v350
    %v529 = vunpack.c.l.b16 %v351
    %v530 = vunpack.c.h.b16 %v351
    %v531 = vunpack.c.l.b16 %v352
    %v532 = vunpack.c.l.b16 %v353
    %v533 = vunpack.c.h.b16 %v353
    %v534 = vunpack.c.l.b16 %v354
    %v535 = vunpack.c.l.b16 %v355
    %v536 = vunpack.c.h.b16 %v355
    %v537 = vunpack.c.l.b16 %v356
    %v538 = vunpack.c.l.b16 %v357
    %v539 = vunpack.c.h.b16 %v357
    %v540 = vunpack.c.l.b16 %v358
    %v541 = vunpack.c.l.b16 %v359
    %v542 = vunpack.c.h.b16 %v359
    %v543 = vunpack.c.l.b16 %v360
    %v544 = vunpack.c.l.b16 %v361
    %v545 = vunpack.c.h.b16 %v361
    %v546 = vunpack.c.l.b16 %v362
    %v547 = vunpack.c.l.b16 %v363
    %v548 = vunpack.c.h.b16 %v363
    %v549 = vunpack.c.l.b16 %v364
    %v550 = vunpack.c.l.b16 %v365
    %v551 = vunpack.c.h.b16 %v365
    %v552 = vunpack.c.l.b16 %v366
    %v553 = vunpack.c.l.b16 %v367
    %v554 = vunpack.c.h.b16 %v367
    %v555 = vunpack.c.l.b16 %v368
    %v556 = vunpack.c.l.b16 %v369
    %v557 = vunpack.c.h.b16 %v369
    %v558 = vunpack.c.l.b16 %v370
    %v559 = vunpack.c.l.b16 %v371
    %v560 = vunpack.c.h.b16 %v371
    %v561 = vunpack.c.l.b16 %v372
    %v562 = vunpack.c.l.b16 %v373
    %v563 = vunpack.c.h.b16 %v373
    %v564 = vunpack.c.l.b16 %v374
    %v565 = vunpack.c.l.b16 %v375
    %v566 = vunpack.c.h.b16 %v375
    %v567 = vunpack.c.l.b16 %v376
    %v568 = vunpack.c.l.b16 %v377
    %v569 = vunpack.c.h.b16 %v377
    %v570 = vunpack.c.l.b16 %v378
    %v571 = vunpack.c.l.b16 %v379
    %v572 = vunpack.c.h.b16 %v379
    %v573 = vunpack.c.l.b16 %v380
    %v574 = vunpack.c.l.b16 %v381
    %v575 = vunpack.c.h.b16 %v381
    %v576 = vunpack.c.l.b16 %v382
    %v577 = vunpack.c.l.b16 %v383
    %v578 = vunpack.c.h.b16 %v383
    %v579 = vunpack.c.l.b16 %v384
    %v580 = vpack.c.b16 %v487, %v484
    %v581 = vpack.c.b16 %v488, %v485
    %v582 = vpack.c.b16 %v489, %v486
    %v583 = vpack.c.b16 %v493, %v490
    %v584 = vpack.c.b16 %v494, %v491
    %v585 = vpack.c.b16 %v495, %v492
    %v586 = vpack.c.b16 %v499, %v496
    %v587 = vpack.c.b16 %v500, %v497
    %v588 = vpack.c.b16 %v501, %v498
    %v589 = vpack.c.b16 %v505, %v502
    %v590 = vpack.c.b16 %v506, %v503
    %v591 = vpack.c.b16 %v507, %v504
    %v592 = vpack.c.b16 %v511, %v508
    %v593 = vpack.c.b16 %v512, %v509
    %v594 = vpack.c.b16 %v513, %v510
    %v595 = vpack.c.b16 %v517, %v514
    %v596 = vpack.c.b16 %v518, %v515
    %v597 = vpack.c.b16 %v519, %v516
    %v598 = vpack.c.b16 %v523, %v520
    %v599 = vpack.c.b16 %v524, %v521
    %v600 = vpack.c.b16 %v525, %v522
    %v601 = vpack.c.b16 %v529, %v526
    %v602 = vpack.c.b16 %v530, %v527
    %v603 = vpack.c.b16 %v531, %v528
    %v604 = vpack.c.b16 %v535, %v532
    %v605 = vpack.c.b16 %v536, %v533
    %v606 = vpack.c.b16 %v537, %v534
    %v607 = vpack.c.b16 %v541, %v538
    %v608 = vpack.c.b16 %v542, %v539
    %v609 = vpack.c.b16 %v543, %v540
    %v610 = vpack.c.b16 %v547, %v544
    %v611 = vpack.c.b16 %v548, %v545
    %v612 = vpack.c.b16 %v549, %v546
    %v613 = vpack.c.b16 %v553, %v550
    %v614 = vpack.c.b16 %v554, %v551
    %v615 = vpack.c.b16 %v555, %v552
    %v616 = vpack.c.b16 %v559, %v556
    %v617 = vpack.c.b16 %v560, %v557
    %v618 = vpack.c.b16 %v561, %v558
    %v619 = vpack.c.b16 %v565, %v562
    %v620 = vpack.c.b16 %v566, %v563
    %v621 = vpack.c.b16 %v567, %v564
    %v622 = vpack.c.b16 %v571, %v568
    %v623 = vpack.c.b16 %v572, %v569
    %v624 = vpack.c.b16 %v573, %v570
    %v625 = vpack.c.b16 %v577, %v574
    %v626 = vpack.c.b16 %v578, %v575
    %v627 = vpack.c.b16 %v579, %v576
    %v677 = vlaneseq
    %v678 = vshrl.u32 %v677, 7
    %v679 = vsub.s32 0, %v678
    %v680 = vrot.slane %v417, %v679
    %v681 = vlaneseq
    %v682 = vshrl.u32 %v681, 7
    %v683 = vsub.s32 2, %v682
    %v684 = vrot.slane %v417, %v683
    %v685 = vlaneseq
    %v686 = vshrl.u32 %v685, 7
    %v687 = vsub.s32 4, %v686
    %v688 = vrot.slane %v417, %v687
    %692 = vmatprep.subr.bf16.mxu0 %v581
    %693 = vmatpush1.bf16.msra.mxu0 %v580
    %694 = vmatprep.subr.bf16.mxu0 %v584
    %695 = vmatpush1.bf16.msra.mxu0 %v583
    %696 = vmatprep.subr.bf16.mxu0 %v587
    %697 = vmatpush1.bf16.msra.mxu0 %v586
    %698 = vmatprep.subr.bf16.mxu0 %v590
    %699 = vmatpush1.bf16.msra.mxu0 %v589
    %700 = vmatprep.subr.bf16.mxu0 %v593
    %701 = vmatpush1.bf16.msra.mxu0 %v592
    %702 = vmatprep.subr.bf16.mxu0 %v596
    %703 = vmatpush1.bf16.msra.mxu0 %v595
    %704 = vmatprep.subr.bf16.mxu0 %v599
    %705 = vmatpush1.bf16.msra.mxu0 %v598
    %706 = vmatprep.subr.bf16.mxu0 %v602
    %707 = vmatpush1.bf16.msra.mxu0 %v601
    %708 = vmatprep.subr.bf16.mxu0 %v605
    %709 = vmatpush1.bf16.msra.mxu0 %v604
    %710 = vmatprep.subr.bf16.mxu0 %v608
    %711 = vmatpush1.bf16.msra.mxu0 %v607
    %712 = vmatprep.subr.bf16.mxu0 %v611
    %713 = vmatpush1.bf16.msra.mxu0 %v610
    %714 = vmatprep.subr.bf16.mxu0 %v614
    %715 = vmatpush1.bf16.msra.mxu0 %v613
    %716 = vmatprep.subr.bf16.mxu0 %v617
    %717 = vmatpush1.bf16.msra.mxu0 %v616
    %718 = vmatprep.subr.bf16.mxu0 %v620
    %719 = vmatpush1.bf16.msra.mxu0 %v619
    %720 = vmatprep.subr.bf16.mxu0 %v623
    %721 = vmatpush1.bf16.msra.mxu0 %v622
    %722 = vmatprep.subr.bf16.mxu0 %v626
    %723 = vmatpush1.bf16.msra.mxu0 %v625
    %724 = vmatprep.mubr.bf16.mxu0 %v419
    %725 = vmatmul.mubr.bf16.gmra.mrb[0].mxu0 %v418
    %v726 = vpop.f32.mrb[0].mxu0
    %v727 = vadd.f32 %v680, %v726
    %v728 = vpop.f32.mrb[0].mxu0
    %v729 = vadd.f32 %v684, %v728
    %v730 = vpop.f32.mrb[0].mxu0
    %v731 = vpop.f32.mrb[0].mxu0
    %732 = vdwg.mxu0
    %733 = vmatprep.subr.bf16.mxu0 0
    %734 = vmatpush1.bf16.msra.mxu0 %v582
    %735 = vmatprep.subr.bf16.mxu0 0
    %736 = vmatpush1.bf16.msra.mxu0 %v585
    %737 = vmatprep.subr.bf16.mxu0 0
    %738 = vmatpush1.bf16.msra.mxu0 %v588
    %739 = vmatprep.subr.bf16.mxu0 0
    %740 = vmatpush1.bf16.msra.mxu0 %v591
    %741 = vmatprep.subr.bf16.mxu0 0
    %742 = vmatpush1.bf16.msra.mxu0 %v594
    %743 = vmatprep.subr.bf16.mxu0 0
    %744 = vmatpush1.bf16.msra.mxu0 %v597
    %745 = vmatprep.subr.bf16.mxu0 0
    %746 = vmatpush1.bf16.msra.mxu0 %v600
    %747 = vmatprep.subr.bf16.mxu0 0
    %748 = vmatpush1.bf16.msra.mxu0 %v603
    %749 = vmatprep.subr.bf16.mxu0 0
    %750 = vmatpush1.bf16.msra.mxu0 %v606
    %751 = vmatprep.subr.bf16.mxu0 0
    %752 = vmatpush1.bf16.msra.mxu0 %v609
    %753 = vmatprep.subr.bf16.mxu0 0
    %754 = vmatpush1.bf16.msra.mxu0 %v612
    %755 = vmatprep.subr.bf16.mxu0 0
    %756 = vmatpush1.bf16.msra.mxu0 %v615
    %757 = vmatprep.subr.bf16.mxu0 0
    %758 = vmatpush1.bf16.msra.mxu0 %v618
    %759 = vmatprep.subr.bf16.mxu0 0
    %760 = vmatpush1.bf16.msra.mxu0 %v621
    %761 = vmatprep.subr.bf16.mxu0 0
    %762 = vmatpush1.bf16.msra.mxu0 %v624
    %763 = vmatprep.subr.bf16.mxu0 0
    %764 = vmatpush1.bf16.msra.mxu0 %v627
    %765 = vmatprep.mubr.bf16.mxu0 %v419
    %766 = vmatmul.mubr.bf16.gmra.mrb[0].mxu0 %v418
    %v767 = vpop.f32.mrb[0].mxu0
    %v768 = vadd.f32 %v688, %v767
    %v769 = vpop.f32.mrb[0].mxu0
    %v770 = vpop.f32.mrb[0].mxu0
    %v771 = vpop.f32.mrb[0].mxu0
    %772 = vdwg.mxu0
    %v773 = vpack.c.bf16 %v54, %v54
    %v806 = vunpack.c.l.b16 %v385
    %v807 = vunpack.c.h.b16 %v385
    %v808 = vunpack.c.l.b16 %v386
    %v809 = vunpack.c.l.b16 %v387
    %v810 = vunpack.c.h.b16 %v387
    %v811 = vunpack.c.l.b16 %v388
    %v812 = vunpack.c.l.b16 %v389
    %v813 = vunpack.c.h.b16 %v389
    %v814 = vunpack.c.l.b16 %v390
    %v815 = vunpack.c.l.b16 %v391
    %v816 = vunpack.c.h.b16 %v391
    %v817 = vunpack.c.l.b16 %v392
    %v818 = vunpack.c.l.b16 %v393
    %v819 = vunpack.c.h.b16 %v393
    %v820 = vunpack.c.l.b16 %v394
    %v821 = vunpack.c.l.b16 %v395
    %v822 = vunpack.c.h.b16 %v395
    %v823 = vunpack.c.l.b16 %v396
    %v824 = vunpack.c.l.b16 %v397
    %v825 = vunpack.c.h.b16 %v397
    %v826 = vunpack.c.l.b16 %v398
    %v827 = vunpack.c.l.b16 %v399
    %v828 = vunpack.c.h.b16 %v399
    %v829 = vunpack.c.l.b16 %v400
    %v830 = vunpack.c.l.b16 %v401
    %v831 = vunpack.c.h.b16 %v401
    %v832 = vunpack.c.l.b16 %v402
    %v833 = vunpack.c.l.b16 %v403
    %v834 = vunpack.c.h.b16 %v403
    %v835 = vunpack.c.l.b16 %v404
    %v836 = vunpack.c.l.b16 %v405
    %v837 = vunpack.c.h.b16 %v405
    %v838 = vunpack.c.l.b16 %v406
    %v839 = vunpack.c.l.b16 %v407
    %v840 = vunpack.c.h.b16 %v407
    %v841 = vunpack.c.l.b16 %v408
    %v842 = vunpack.c.l.b16 %v409
    %v843 = vunpack.c.h.b16 %v409
    %v844 = vunpack.c.l.b16 %v410
    %v845 = vunpack.c.l.b16 %v411
    %v846 = vunpack.c.h.b16 %v411
    %v847 = vunpack.c.l.b16 %v412
    %v848 = vunpack.c.l.b16 %v413
    %v849 = vunpack.c.h.b16 %v413
    %v850 = vunpack.c.l.b16 %v414
    %v851 = vunpack.c.l.b16 %v415
    %v852 = vunpack.c.h.b16 %v415
    %v853 = vunpack.c.l.b16 %v416
    %v854 = vpack.c.b16 %v809, %v806
    %v855 = vpack.c.b16 %v810, %v807
    %v856 = vpack.c.b16 %v811, %v808
    %v857 = vpack.c.b16 %v815, %v812
    %v858 = vpack.c.b16 %v816, %v813
    %v859 = vpack.c.b16 %v817, %v814
    %v860 = vpack.c.b16 %v821, %v818
    %v861 = vpack.c.b16 %v822, %v819
    %v862 = vpack.c.b16 %v823, %v820
    %v863 = vpack.c.b16 %v827, %v824
    %v864 = vpack.c.b16 %v828, %v825
    %v865 = vpack.c.b16 %v829, %v826
    %v866 = vpack.c.b16 %v833, %v830
    %v867 = vpack.c.b16 %v834, %v831
    %v868 = vpack.c.b16 %v835, %v832
    %v869 = vpack.c.b16 %v839, %v836
    %v870 = vpack.c.b16 %v840, %v837
    %v871 = vpack.c.b16 %v841, %v838
    %v872 = vpack.c.b16 %v845, %v842
    %v873 = vpack.c.b16 %v846, %v843
    %v874 = vpack.c.b16 %v847, %v844
    %v875 = vpack.c.b16 %v851, %v848
    %v876 = vpack.c.b16 %v852, %v849
    %v877 = vpack.c.b16 %v853, %v850
    %v902 = vlaneseq
    %v903 = vshrl.u32 %v902, 7
    %v904 = vsub.s32 1, %v903
    %v905 = vrot.slane %v417, %v904
    %v906 = vlaneseq
    %v907 = vshrl.u32 %v906, 7
    %v908 = vsub.s32 3, %v907
    %v909 = vrot.slane %v417, %v908
    %v910 = vlaneseq
    %v911 = vshrl.u32 %v910, 7
    %v912 = vsub.s32 5, %v911
    %v913 = vrot.slane %v417, %v912
    %917 = vmatprep.subr.bf16.mxu0 %v855
    %918 = vmatpush1.bf16.msra.mxu0 %v854
    %919 = vmatprep.subr.bf16.mxu0 %v858
    %920 = vmatpush1.bf16.msra.mxu0 %v857
    %921 = vmatprep.subr.bf16.mxu0 %v861
    %922 = vmatpush1.bf16.msra.mxu0 %v860
    %923 = vmatprep.subr.bf16.mxu0 %v864
    %924 = vmatpush1.bf16.msra.mxu0 %v863
    %925 = vmatprep.subr.bf16.mxu0 %v867
    %926 = vmatpush1.bf16.msra.mxu0 %v866
    %927 = vmatprep.subr.bf16.mxu0 %v870
    %928 = vmatpush1.bf16.msra.mxu0 %v869
    %929 = vmatprep.subr.bf16.mxu0 %v873
    %930 = vmatpush1.bf16.msra.mxu0 %v872
    %931 = vmatprep.subr.bf16.mxu0 %v876
    %932 = vmatpush1.bf16.msra.mxu0 %v875
    %933 = vmatprep.subr.bf16.mxu0 0
    %934 = vmatpush1.bf16.msra.mxu0 0
    %935 = vmatprep.subr.bf16.mxu0 0
    %936 = vmatpush1.bf16.msra.mxu0 0
    %937 = vmatprep.subr.bf16.mxu0 0
    %938 = vmatpush1.bf16.msra.mxu0 0
    %939 = vmatprep.subr.bf16.mxu0 0
    %940 = vmatpush1.bf16.msra.mxu0 0
    %941 = vmatprep.subr.bf16.mxu0 0
    %942 = vmatpush1.bf16.msra.mxu0 0
    %943 = vmatprep.subr.bf16.mxu0 0
    %944 = vmatpush1.bf16.msra.mxu0 0
    %945 = vmatprep.subr.bf16.mxu0 0
    %946 = vmatpush1.bf16.msra.mxu0 0
    %947 = vmatprep.subr.bf16.mxu0 0
    %948 = vmatpush1.bf16.msra.mxu0 0
    %949 = vmatprep.mubr.bf16.mxu0 0
    %950 = vmatmul.mubr.bf16.gmra.mrb[0].mxu0 %v773
    %v951 = vpop.f32.mrb[0].mxu0
    %v952 = vadd.f32 %v905, %v951
    %v953 = vpop.f32.mrb[0].mxu0
    %v954 = vadd.f32 %v909, %v953
    %v955 = vpop.f32.mrb[0].mxu0
    %v956 = vpop.f32.mrb[0].mxu0
    %957 = vdwg.mxu0
    %958 = vmatprep.subr.bf16.mxu0 0
    %959 = vmatpush1.bf16.msra.mxu0 %v856
    %960 = vmatprep.subr.bf16.mxu0 0
    %961 = vmatpush1.bf16.msra.mxu0 %v859
    %962 = vmatprep.subr.bf16.mxu0 0
    %963 = vmatpush1.bf16.msra.mxu0 %v862
    %964 = vmatprep.subr.bf16.mxu0 0
    %965 = vmatpush1.bf16.msra.mxu0 %v865
    %966 = vmatprep.subr.bf16.mxu0 0
    %967 = vmatpush1.bf16.msra.mxu0 %v868
    %968 = vmatprep.subr.bf16.mxu0 0
    %969 = vmatpush1.bf16.msra.mxu0 %v871
    %970 = vmatprep.subr.bf16.mxu0 0
    %971 = vmatpush1.bf16.msra.mxu0 %v874
    %972 = vmatprep.subr.bf16.mxu0 0
    %973 = vmatpush1.bf16.msra.mxu0 %v877
    %974 = vmatprep.subr.bf16.mxu0 0
    %975 = vmatpush1.bf16.msra.mxu0 0
    %976 = vmatprep.subr.bf16.mxu0 0
    %977 = vmatpush1.bf16.msra.mxu0 0
    %978 = vmatprep.subr.bf16.mxu0 0
    %979 = vmatpush1.bf16.msra.mxu0 0
    %980 = vmatprep.subr.bf16.mxu0 0
    %981 = vmatpush1.bf16.msra.mxu0 0
    %982 = vmatprep.subr.bf16.mxu0 0
    %983 = vmatpush1.bf16.msra.mxu0 0
    %984 = vmatprep.subr.bf16.mxu0 0
    %985 = vmatpush1.bf16.msra.mxu0 0
    %986 = vmatprep.subr.bf16.mxu0 0
    %987 = vmatpush1.bf16.msra.mxu0 0
    %988 = vmatprep.subr.bf16.mxu0 0
    %989 = vmatpush1.bf16.msra.mxu0 0
    %990 = vmatprep.mubr.bf16.mxu0 0
    %991 = vmatmul.mubr.bf16.gmra.mrb[0].mxu0 %v773
    %v992 = vpop.f32.mrb[0].mxu0
    %v993 = vadd.f32 %v913, %v992
    %v994 = vpop.f32.mrb[0].mxu0
    %v995 = vpop.f32.mrb[0].mxu0
    %v996 = vpop.f32.mrb[0].mxu0
    %997 = vdwg.mxu0
    %v998 = vadd.f32 %v727, %v952
    %v999 = vxor.u32 %v998, 2147483648
    %v1000 = vmul.f32 %v999, 1.442695
    %v1001 = vpow.pop %v1000
    %v1002 = vadd.f32 %v1001, 1.0
    %v1003 = vrcp.pop %v1002
    %v1004 = vmul.f32 1.0, %v1003
    %v1005 = vadd.f32 %v729, %v954
    %v1006 = vxor.u32 %v1005, 2147483648
    %v1007 = vmul.f32 %v1006, 1.442695
    %v1008 = vpow.pop %v1007
    %v1009 = vadd.f32 %v1008, 1.0
    %v1010 = vrcp.pop %v1009
    %v1011 = vmul.f32 1.0, %v1010
    %v1012 = vmul.f32 %v1004, %v993
    %v1013 = vadd.f32 %v768, %v1012
    %v1014 = vtanh.pop %v1013
    %v1015 = vsub.f32 1.0, %v1011
    %v1016 = vmul.f32 %v1015, %v1014
    %v1017 = vmul.f32 %v1011, %v54
    %v1018 = vadd.f32 %v1016, %v1017
    %1019 = vst [vmem:[#allocation9] sm:$0x1] %v1018
    // Predicated region
    $region42: #{tpu_custom_call.1} parent=1 // pred_check
      _
    $region43: #{tpu_custom_call.1} parent=1 // pred_check_branch
      %1021 = sbr.rel (0) target = $region45
    $region44: #{tpu_custom_call.1} parent=1 // pred_region
      %s1023 = ssub.s32 16, 16
      %1024 = vsyncadd [#allocation7], %s1023
      %1027 = dma.smem_to_hbm [#allocation8], 16, %s9, [#allocation7]
    $region45: #{tpu_custom_call.1} parent=1 // pred_fallthru
      _
    // Predicated region
    $region46: #{tpu_custom_call.1} parent=1 // pred_check
      _
    $region47: #{tpu_custom_call.1} parent=1 // pred_check_branch
      %1029 = sbr.rel (0) target = $region49
    $region48: #{tpu_custom_call.1} parent=1 // pred_region
      %s1031 = ssub.s32 16, 16
      %1032 = vsyncadd [#allocation6], %s1031
      %s1034 = sshll.u32 [#allocation9], 4
      %s1035 = int_to_ptr.vmem [resolvable:$true] %s1034
      %1037 = dma.vmem_to_hbm [thread:$0]  %s1035, 16, %s10, [#allocation6]
    $region49: #{tpu_custom_call.1} parent=1 // pred_fallthru
      _
    // Predicated region
    $region50: #{tpu_custom_call.1} parent=1 // pred_check
      _
    $region51: #{tpu_custom_call.1} parent=1 // pred_check_branch
      %1039 = sbr.rel (0) target = $region53
    $region52: #{tpu_custom_call.1} parent=1 // pred_region
      %1040 = dma.done [#allocation7], 16
    $region53: #{tpu_custom_call.1} parent=1 // pred_fallthru
      _
    // Predicated region
    $region54: #{tpu_custom_call.1} parent=1 // pred_check
      _
    $region55: #{tpu_custom_call.1} parent=1 // pred_check_branch
      %1042 = sbr.rel (0) target = $region57
    $region56: #{tpu_custom_call.1} parent=1 // pred_region
      %1043 = dma.done [#allocation6], 16
    $region57: #{tpu_custom_call.1} parent=1 // pred_fallthru
      _
    %1044 = sfence
    %1045 = vsyncpa [#allocation5], 1
    %1046 = vsyncpa [#allocation6], 1
    %1047 = vsyncpa [#allocation7], 1

</llo_original>
